<compile_context>
chip_gen: v5e
topology: v5e:2x2
jax: 0.10.0
libtpu: 0.0.40
codegen_flags: <defaults>
</compile_context>

<pallas_src>
import jax
import jax.numpy as jnp
from jax.experimental import pallas as pl
from jax.experimental.pallas import tpu as pltpu


def _residual_gate_kernel(gate_ref, old_ref, new_ref, out_ref):
    # gate_ref: (R, 1) f32, pre-scaled by 1/D
    # old_ref / new_ref / out_ref: (R, D) in the input dtype
    old = old_ref[...]
    new = new_ref[...]

    summed = new + old                 # (R, D) — reused for status and output
    diff = new - old                   # (R, D)

    # Status: lane-sum in f32; gate already carries the 1/D factor.
    status = jnp.sum(summed.astype(jnp.float32), axis=-1, keepdims=True)  # (R, 1)
    g = jnp.tanh(gate_ref[...] * status)                                   # (R, 1) f32

    # (1+g)*new + (1-g)*old == (new+old) + g*(new-old)
    out_ref[...] = summed + g.astype(summed.dtype) * diff


def _choose_row_tile(rows: int, d: int, itemsize: int,
                     target_bytes: int = 2 * 1024 * 1024) -> int:
    """Largest row tile (multiple of 8, <=2048) with ~target_bytes per array."""
    max_rows_by_bytes = max(8, target_bytes // max(1, d * itemsize))
    tile = min(rows, max_rows_by_bytes, 2048)
    if tile < rows:
        tile = max(8, (tile // 8) * 8)
    return int(tile)


def residual_gate(old_value: jax.Array, new_value: jax.Array, gate_param: jax.Array):
    """old_value, new_value: (B, S, D); gate_param: (S, 1). Returns (B, S, D)."""
    B, S, D = old_value.shape
    assert new_value.shape == (B, S, D)
    assert gate_param.shape == (S, 1)
    dtype = old_value.dtype

    rows = B * S
    old2d = old_value.reshape(rows, D)
    new2d = new_value.reshape(rows, D)

    # Fold the mean's 1/D into the gate and tile it across batch -> (B*S, 1) f32.
    gate_rows = jnp.broadcast_to(
        (gate_param.astype(jnp.float32) * (1.0 / D))[None, :, :], (B, S, 1)
    ).reshape(rows, 1)

    row_tile = _choose_row_tile(rows, D, jnp.dtype(dtype).itemsize)
    num_tiles = pl.cdiv(rows, row_tile)
    padded_rows = num_tiles * row_tile
    if padded_rows != rows:
        pad = padded_rows - rows
        old2d = jnp.pad(old2d, ((0, pad), (0, 0)))
        new2d = jnp.pad(new2d, ((0, pad), (0, 0)))
        gate_rows = jnp.pad(gate_rows, ((0, pad), (0, 0)))

    out2d = pl.pallas_call(
        _residual_gate_kernel,
        out_shape=jax.ShapeDtypeStruct((padded_rows, D), dtype),
        grid_spec=pltpu.PrefetchScalarGridSpec(
            num_scalar_prefetch=0,
            grid=(num_tiles,),
            in_specs=[
                pl.BlockSpec((row_tile, 1), lambda i: (i, 0)),  # gate (pre-scaled)
                pl.BlockSpec((row_tile, D), lambda i: (i, 0)),  # old rows
                pl.BlockSpec((row_tile, D), lambda i: (i, 0)),  # new rows
            ],
            out_specs=pl.BlockSpec((row_tile, D), lambda i: (i, 0)),
        ),
        compiler_params=pltpu.CompilerParams(
            dimension_semantics=("parallel",),
            vmem_limit_bytes=48 * 1024 * 1024,
        ),
    )(gate_rows, old2d, new2d)

    if padded_rows != rows:
        out2d = out2d[:rows]
    return out2d.reshape(B, S, D)


def residual_gate_ref(old_value, new_value, gate_param):
    """Pure-JAX reference matching the PyTorch forward."""
    status = jnp.mean(new_value + old_value, axis=-1, keepdims=True)
    g = jnp.tanh(gate_param[None, :, :] * status)
    return (1.0 + g) * new_value + (1.0 - g) * old_value


if __name__ == "__main__":
    # Small shapes: batch=2, stm_size (slots) = 8, embed_dim = 32
    B, S, D = 2, 8, 32

    key = jax.random.PRNGKey(0)
    k_old, k_new = jax.random.split(key)
    old_value = jax.random.normal(k_old, (B, S, D), dtype=jnp.float32)
    new_value = jax.random.normal(k_new, (B, S, D), dtype=jnp.float32)

    # Deterministic per-slot gate parameter (shape (stm_size, 1) per module __init__).
    gate_param = jnp.linspace(-0.5, 0.5, S, dtype=jnp.float32).reshape(S, 1)

    out = residual_gate(old_value, new_value, gate_param)
    out = jax.block_until_ready(out)

    ref = residual_gate_ref(old_value, new_value, gate_param)
    assert out.shape == (B, S, D)
    assert jnp.allclose(out, ref, atol=1e-5, rtol=1e-5)

    print("KERNEL_OK")
</pallas_src>

<mosaic_0001>
module attributes {stable_mosaic.version = 11 : i64} {
  func.func @_residual_gate_kernel(%arg0: i32, %arg1: memref<16x1xf32, #tpu.memory_space<vmem>>, %arg2: memref<16x32xf32, #tpu.memory_space<vmem>>, %arg3: memref<16x32xf32, #tpu.memory_space<vmem>>, %arg4: memref<16x32xf32, #tpu.memory_space<vmem>>) attributes {dimension_semantics = [#tpu.dimension_semantics<parallel>], iteration_bounds = array<i64: 1>, scalar_prefetch = 0 : i64, scratch_operands = 0 : i64, tpu.core_type = #tpu.core_type<tc>, window_params = [{transform_indices = @transform_0, window_bounds = array<i64: 16, 1>}, {transform_indices = @transform_1, window_bounds = array<i64: 16, 32>}, {transform_indices = @transform_2, window_bounds = array<i64: 16, 32>}, {transform_indices = @transform_3, window_bounds = array<i64: 16, 32>}]} {
    %c0 = arith.constant 0 : index
    %c0_0 = arith.constant 0 : index
    %0 = vector.load %arg2[%c0, %c0_0] : memref<16x32xf32, #tpu.memory_space<vmem>>, vector<16x32xf32>
    %c0_1 = arith.constant 0 : index
    %c0_2 = arith.constant 0 : index
    %1 = vector.load %arg3[%c0_1, %c0_2] : memref<16x32xf32, #tpu.memory_space<vmem>>, vector<16x32xf32>
    %2 = arith.addf %1, %0 : vector<16x32xf32>
    %3 = arith.subf %1, %0 : vector<16x32xf32>
    %cst = arith.constant dense<0.000000e+00> : vector<16xf32>
    %4 = vector.multi_reduction <add>, %2, %cst [1] : vector<16x32xf32> to vector<16xf32>
    %5 = vector.shape_cast %4 : vector<16xf32> to vector<16x1xf32>
    %c0_3 = arith.constant 0 : index
    %c0_4 = arith.constant 0 : index
    %6 = vector.load %arg1[%c0_3, %c0_4] : memref<16x1xf32, #tpu.memory_space<vmem>>, vector<16x1xf32>
    %7 = arith.mulf %6, %5 : vector<16x1xf32>
    %8 = math.tanh %7 : vector<16x1xf32>
    %9 = vector.broadcast %8 : vector<16x1xf32> to vector<16x32xf32>
    %10 = arith.mulf %9, %3 : vector<16x32xf32>
    %11 = arith.addf %2, %10 : vector<16x32xf32>
    %c0_5 = arith.constant 0 : index
    %c0_6 = arith.constant 0 : index
    %12 = vector.load %arg4[%c0_5, %c0_6] : memref<16x32xf32, #tpu.memory_space<vmem>>, vector<16x32xf32>
    tpu.vector_store %arg4[%c0_5, %c0_6], %11 {strides = array<i32>} : memref<16x32xf32, #tpu.memory_space<vmem>>, vector<16x32xf32>,
    return
  }
  func.func @transform_0(%arg0: i32) -> (i32, i32) {
    %c0_i32 = arith.constant 0 : i32
    %c0_i32_0 = arith.constant 0 : i32
    return %arg0, %c0_i32 : i32, i32
  }
  func.func @transform_1(%arg0: i32) -> (i32, i32) {
    %c0_i32 = arith.constant 0 : i32
    %c0_i32_0 = arith.constant 0 : i32
    return %arg0, %c0_i32 : i32, i32
  }
  func.func @transform_2(%arg0: i32) -> (i32, i32) {
    %c0_i32 = arith.constant 0 : i32
    %c0_i32_0 = arith.constant 0 : i32
    return %arg0, %c0_i32 : i32, i32
  }
  func.func @transform_3(%arg0: i32) -> (i32, i32) {
    %c0_i32 = arith.constant 0 : i32
    %c0_i32_0 = arith.constant 0 : i32
    return %arg0, %c0_i32 : i32, i32
  }
}

</mosaic_0001>

<llo_original>
// kernel: tpu_custom_call.1
$region0: #{tpu_custom_call.1}
  #allocation0 [shape = 'u32[]', space=smem, size = 0x4, offset = 0x4, fixed_abs, tag = 'smem constant byte address 0x4 - core index']
  #allocation1 [shape = 'u32[72,128]{1,0:T(1,128)}', space=vmem, size = 0x9000, scoped, tag = 'internal scratch']
  %s0 = inlined_call_operand.vmem [shape: f32[16,1], index: 0, kind: input, shape index: {}]
  %s1 = inlined_call_operand.vmem [shape: f32[16,32], index: 1, kind: input, shape index: {}]
  %s2 = inlined_call_operand.hbm [shape: f32[16,32], index: 2, kind: input, shape index: {}]
  %s3 = inlined_call_operand.hbm [shape: f32[16,32], index: 3, kind: output, shape index: {}]
  %s4 = sld [smem:[#allocation0]]
  $region26: #{tpu_custom_call.1} parent=0
    _
  %s6 = ssub.s32 1, %s4
  %s7 = scalar_select 0, %s6, %s4
  $region1: #{tpu_custom_call.1} parent=0
    #allocation2 [shape = 'u8[8192]{0}', space=vmem, size = 0x2000, scoped, tag = 'input window, operand 2, single buffered']
    #allocation3 [shape = 's32[1]{0}', space=sflag, size = 0x4, scoped, tag = 'scoped memory for tpu_custom_call.1']
    #allocation4 [shape = 's32[1]{0}', space=sflag, size = 0x4, scoped, tag = 'scoped memory for tpu_custom_call.1']
    #allocation5 [shape = 'u8[8192]{0}', space=vmem, size = 0x2000, scoped, tag = 'output window, operand 0, single buffered']
    %8 = vsyncpa [#allocation3], 0
    %9 = vsyncpa [#allocation4], 0
    // Predicated region
    $region2: #{tpu_custom_call.1} parent=1 // pred_check
      _
    $region3: #{tpu_custom_call.1} parent=1 // pred_check_branch
      %11 = sbr.rel (0) target = $region5
    $region4: #{tpu_custom_call.1} parent=1 // pred_region
      _
    $region5: #{tpu_custom_call.1} parent=1 // pred_fallthru
      _
    // Predicated region
    $region6: #{tpu_custom_call.1} parent=1 // pred_check
      _
    $region7: #{tpu_custom_call.1} parent=1 // pred_check_branch
      %13 = sbr.rel (0) target = $region9
    $region8: #{tpu_custom_call.1} parent=1 // pred_region
      _
    $region9: #{tpu_custom_call.1} parent=1 // pred_fallthru
      _
    // Predicated region
    $region10: #{tpu_custom_call.1} parent=1 // pred_check
      _
    $region11: #{tpu_custom_call.1} parent=1 // pred_check_branch
      %15 = sbr.rel (0) target = $region13
    $region12: #{tpu_custom_call.1} parent=1 // pred_region
      %17 = vsyncadd [#allocation3], 0
      %s18 = sshll.u32 %s2, 4
      %s19 = int_to_ptr.hbm [resolvable:$true] %s18
      %s20 = sshll.u32 [#allocation2], 4
      %s21 = int_to_ptr.vmem [resolvable:$true] %s20
      %26 = dma.hbm_to_vmem [thread:$0]  %s19, 256, %s21, [#allocation3], 128, 128, 8
    $region13: #{tpu_custom_call.1} parent=1 // pred_fallthru
      _
    // Predicated region
    $region14: #{tpu_custom_call.1} parent=1 // pred_check
      _
    $region15: #{tpu_custom_call.1} parent=1 // pred_check_branch
      %28 = sbr.rel (0) target = $region17
    $region16: #{tpu_custom_call.1} parent=1 // pred_region
      %30 = dma.done [#allocation3], 256
    $region17: #{tpu_custom_call.1} parent=1 // pred_fallthru
      _
    %v31 = vld [vmem:[%s1] sm:$0xff]
    %v32 = vld [vmem:[%s1 + $0x8] sm:$0xff]
    %v33 = vld [vmem:[#allocation2] sm:$0xff]
    %v34 = vld [vmem:[#allocation2 + $0x8] sm:$0xff]
    %v35 = vadd.f32 %v33, %v31
    %v36 = vadd.f32 %v34, %v32
    %v37 = vsub.f32 %v33, %v31
    %v38 = vsub.f32 %v34, %v32
    %vm39 = vcmask 261120
    %v40 = vsel %vm39, %v35, 0.0
    %41 = vadd.xlane.f32.xlu0 %v40
    %v42 = vpop.xlane.xlu0 %41
    %v43 = vsel %vm39, %v36, 0.0
    %44 = vadd.xlane.f32.xlu0 %v43
    %v45 = vpop.xlane.xlu0 %44
    %v46 = vld [vmem:[%s0] sm:$0xff]
    %v47 = vld [vmem:[%s0 + $0x8] sm:$0xff]
    %v48 = vmul.f32 %v46, %v42
    %v49 = vmul.f32 %v47, %v45
    %v50 = vtanh.pop %v48
    %v51 = vtanh.pop %v49
    %53 = vset.pattern.permute.xlu0 0
    %54 = vperm.xlu0 %53, %v50
    %v55 = vpop.permute.xlu0 %54
    %58 = vset.pattern.permute.xlu0 0
    %59 = vperm.xlu0 %58, %v51
    %v60 = vpop.permute.xlu0 %59
    %v62 = vmul.f32 %v55, %v37
    %v63 = vmul.f32 %v60, %v38
    %v64 = vadd.f32 %v35, %v62
    %v65 = vadd.f32 %v36, %v63
    %66 = vst.msk [vmem:[#allocation5] sm:$0xff] %vm39, %v64
    %67 = vst.msk [vmem:[#allocation5 + $0x8] sm:$0xff] %vm39, %v65
    // Predicated region
    $region18: #{tpu_custom_call.1} parent=1 // pred_check
      _
    $region19: #{tpu_custom_call.1} parent=1 // pred_check_branch
      %69 = sbr.rel (0) target = $region21
    $region20: #{tpu_custom_call.1} parent=1 // pred_region
      %71 = vsyncadd [#allocation4], 0
      %s72 = sshll.u32 [#allocation5], 4
      %s73 = int_to_ptr.vmem [resolvable:$true] %s72
      %s74 = sshll.u32 %s3, 4
      %s75 = int_to_ptr.hbm [resolvable:$true] %s74
      %80 = dma.vmem_to_hbm [thread:$0]  %s73, 256, %s75, [#allocation4], 128, 128, 8
    $region21: #{tpu_custom_call.1} parent=1 // pred_fallthru
      _
    // Predicated region
    $region22: #{tpu_custom_call.1} parent=1 // pred_check
      _
    $region23: #{tpu_custom_call.1} parent=1 // pred_check_branch
      %82 = sbr.rel (0) target = $region25
    $region24: #{tpu_custom_call.1} parent=1 // pred_region
      %84 = dma.done [#allocation4], 256
    $region25: #{tpu_custom_call.1} parent=1 // pred_fallthru
      _
    %85 = vsyncpa [#allocation3], 1
    %86 = vsyncpa [#allocation4], 1

</llo_original>
